<compile_context>
chip_gen: v7x
topology: tpu7x:2x2x1
jax: 0.10.0
libtpu: 0.0.40
codegen_flags: <defaults>
</compile_context>

<pallas_src>
import numpy as np
import jax
import jax.numpy as jnp
from jax.experimental import pallas as pl
from jax.experimental.pallas import tpu as pltpu


def muscall_kernel(ls_ref, a_feat_ref, t_feat_ref, wa_ref, wt_ref,
                   logits_ref, loss_ref,
                   t_bf_ref, t_f32_ref, col_m_ref, col_s_ref,
                   acc_audio_ref, acc_diag_ref):
    i = pl.program_id(0)
    nb = pl.num_programs(0)
    tq = a_feat_ref.shape[0]
    B = t_f32_ref.shape[0]

    scale = jnp.exp(ls_ref[0])          # single scalar exp

    # ---- one-time (first row block): project + L2-normalize text features ----
    @pl.when(i == 0)
    def _():
        t = jnp.dot(t_feat_ref[...], wt_ref[...],
                    preferred_element_type=jnp.float32)
        t = t * jax.lax.rsqrt(jnp.sum(t * t, axis=-1, keepdims=True))
        t_bf = t.astype(jnp.bfloat16)
        t_bf_ref[...] = t_bf                        # MXU operand (bf16)
        t_f32_ref[...] = t_bf.astype(jnp.float32)   # same values, f32, for diag
        col_m_ref[...] = jnp.full_like(col_m_ref, -jnp.inf)
        col_s_ref[...] = jnp.zeros_like(col_s_ref)
        acc_audio_ref[...] = jnp.zeros_like(acc_audio_ref)
        acc_diag_ref[...] = jnp.zeros_like(acc_diag_ref)

    # ---- project + normalize this audio row block; fold exp(logit_scale) ----
    a = jnp.dot(a_feat_ref[...], wa_ref[...],
                preferred_element_type=jnp.float32)
    a = a * (scale * jax.lax.rsqrt(jnp.sum(a * a, axis=-1, keepdims=True)))
    a_bf = a.astype(jnp.bfloat16)

    # ---- similarity block: contract last dims (no explicit transpose) ----
    s = jax.lax.dot_general(a_bf, t_bf_ref[...],
                            dimension_numbers=(((1,), (1,)), ((), ())),
                            preferred_element_type=jnp.float32)     # [tq, B]
    logits_ref[...] = s

    # ---- diagonal of this block directly from a . t (no eye mask) ----
    row0 = pl.multiple_of(i * tq, tq)
    t_blk = t_f32_ref[pl.ds(row0, tq), :]                           # [tq, P] f32
    diag = jnp.sum(a_bf.astype(jnp.float32) * t_blk, axis=-1,
                   keepdims=True)                                   # [tq, 1]

    # ---- audio loss: full row LSE is available within the block ----
    row_max = jnp.max(s, axis=-1, keepdims=True)
    row_lse = jnp.log(jnp.sum(jnp.exp(s - row_max), axis=-1,
                              keepdims=True)) + row_max             # [tq, 1]
    acc_audio_ref[...] += jnp.sum(row_lse - diag, axis=0, keepdims=True)
    acc_diag_ref[...] += jnp.sum(diag, axis=0, keepdims=True)

    # ---- text loss: online column-wise LSE accumulated across row blocks ----
    blk_cmax = jnp.max(s, axis=0, keepdims=True)                    # [1, B]
    new_m = jnp.maximum(col_m_ref[...], blk_cmax)
    col_s_ref[...] = (col_s_ref[...] * jnp.exp(col_m_ref[...] - new_m)
                      + jnp.sum(jnp.exp(s - new_m), axis=0, keepdims=True))
    col_m_ref[...] = new_m

    # ---- finalize: combine into the symmetric clip loss ----
    @pl.when(i == nb - 1)
    def _():
        col_lse = jnp.log(col_s_ref[...]) + col_m_ref[...]          # [1, B]
        text_num = jnp.sum(col_lse, axis=1, keepdims=True) - acc_diag_ref[...]
        loss_ref[...] = (text_num + acc_audio_ref[...]) * (0.5 / B)


def _pad_axis(x, multiple, axis):
    pad = (-x.shape[axis]) % multiple
    if pad == 0:
        return x
    widths = [(0, 0)] * x.ndim
    widths[axis] = (0, pad)
    return jnp.pad(x, widths)


def muscall_forward(logit_scale, audio_feat, text_feat, w_audio, w_text,
                    *, block_q=256):
    B, _ = audio_feat.shape
    Bt, _ = text_feat.shape
    assert B == Bt
    P = w_audio.shape[1]
    assert w_text.shape[1] == P
    assert B % 8 == 0, "pad the batch to a multiple of 8 (sublane tiling)"

    LANE = 128
    # Zero-pad contraction dims to lane multiples (exact: zero rows/cols add 0)
    # and cast the MXU operands to bf16; accumulation stays f32 in-kernel.
    a_p = _pad_axis(audio_feat, LANE, 1).astype(jnp.bfloat16)
    t_p = _pad_axis(text_feat, LANE, 1).astype(jnp.bfloat16)
    wa_p = _pad_axis(w_audio, LANE, 0).astype(jnp.bfloat16)
    wt_p = _pad_axis(w_text, LANE, 0).astype(jnp.bfloat16)
    Ka, Kt = a_p.shape[1], t_p.shape[1]

    tq = min(block_q, B)
    assert B % tq == 0
    nb = B // tq

    grid_spec = pltpu.PrefetchScalarGridSpec(
        num_scalar_prefetch=0,
        grid=(nb,),
        in_specs=[
            pl.BlockSpec(memory_space=pltpu.MemorySpace.SMEM),    # logit_scale (1,)
            pl.BlockSpec((tq, Ka), lambda i: (i, 0)),             # audio features
            pl.BlockSpec((B, Kt), lambda i: (0, 0)),              # text features
            pl.BlockSpec((Ka, P), lambda i: (0, 0)),              # W_audio
            pl.BlockSpec((Kt, P), lambda i: (0, 0)),              # W_text
        ],
        out_specs=(
            pl.BlockSpec((tq, B), lambda i: (i, 0)),              # logits_per_audio
            pl.BlockSpec((1, 1), lambda i: (0, 0)),               # clip loss
        ),
        scratch_shapes=[
            pltpu.VMEM((B, P), jnp.bfloat16),   # normalized text proj (MXU operand)
            pltpu.VMEM((B, P), jnp.float32),    # same values in f32 (diag slice)
            pltpu.VMEM((1, B), jnp.float32),    # column running max
            pltpu.VMEM((1, B), jnp.float32),    # column running sum(exp)
            pltpu.VMEM((1, 1), jnp.float32),    # sum(row_lse - diag)
            pltpu.VMEM((1, 1), jnp.float32),    # sum(diag)
        ],
    )

    out_shape = (
        jax.ShapeDtypeStruct((B, B), jnp.float32),   # logits_per_audio
        jax.ShapeDtypeStruct((1, 1), jnp.float32),   # loss
    )

    return pl.pallas_call(
        muscall_kernel,
        out_shape=out_shape,
        grid_spec=grid_spec,
        compiler_params=pltpu.CompilerParams(
            # row-block axis carries the column-LSE accumulators -> arbitrary
            dimension_semantics=("arbitrary",),
        ),
    )(logit_scale, a_p, t_p, wa_p, wt_p)


# --------------------------- pure-JAX references ----------------------------

def _clip_loss(logits_per_audio):
    logits_per_text = logits_per_audio.T
    n = logits_per_audio.shape[0]
    labels = jnp.arange(n)

    def ce(m):
        lse = jax.scipy.special.logsumexp(m, axis=-1)
        return jnp.mean(lse - m[jnp.arange(m.shape[0]), labels])

    return 0.5 * (ce(logits_per_text) + ce(logits_per_text.T))


def muscall_reference_mixed(logit_scale, audio_feat, text_feat, w_audio, w_text):
    """Mirrors the kernel's mixed-precision policy (bf16 MXU operands, f32 acc)."""
    a = jnp.dot(audio_feat.astype(jnp.bfloat16), w_audio.astype(jnp.bfloat16),
                preferred_element_type=jnp.float32)
    t = jnp.dot(text_feat.astype(jnp.bfloat16), w_text.astype(jnp.bfloat16),
                preferred_element_type=jnp.float32)
    scale = jnp.exp(logit_scale[0])
    a = (a * (scale * jax.lax.rsqrt(jnp.sum(a * a, -1, keepdims=True)))
         ).astype(jnp.bfloat16)
    t = (t * jax.lax.rsqrt(jnp.sum(t * t, -1, keepdims=True))).astype(jnp.bfloat16)
    logits_per_audio = jax.lax.dot_general(
        a, t, dimension_numbers=(((1,), (1,)), ((), ())),
        preferred_element_type=jnp.float32)
    return logits_per_audio, _clip_loss(logits_per_audio)


def muscall_reference_f32(logit_scale, audio_feat, text_feat, w_audio, w_text):
    """Full-f32 math matching the original PyTorch module."""
    a = audio_feat @ w_audio
    t = text_feat @ w_text
    a = a / jnp.linalg.norm(a, axis=-1, keepdims=True)
    t = t / jnp.linalg.norm(t, axis=-1, keepdims=True)
    scale = jnp.exp(logit_scale[0])
    logits_per_audio = scale * (a @ t.T)
    return logits_per_audio, _clip_loss(logits_per_audio)


if __name__ == "__main__":
    # small, MusCALL-consistent shapes
    B = 8            # batch
    AUDIO_DIM = 64   # audio_config.hidden_size (backbone pooled dim)
    TEXT_DIM = 32    # text_config.hidden_size (pooled text dim)
    PROJ_DIM = 128   # config.projection_dim

    key = jax.random.PRNGKey(0)
    k1, k2, k3, k4 = jax.random.split(key, 4)

    audio_feat = jax.random.normal(k1, (B, AUDIO_DIM), dtype=jnp.float32)
    text_feat = jax.random.normal(k2, (B, TEXT_DIM), dtype=jnp.float32)
    w_audio = jax.random.normal(k3, (AUDIO_DIM, PROJ_DIM), dtype=jnp.float32) * 0.02
    w_text = jax.random.normal(k4, (TEXT_DIM, PROJ_DIM), dtype=jnp.float32) * 0.02

    # temperature is None -> learnable logit_scale initialized to log(1/0.07)
    logit_scale = jnp.array([np.log(1.0 / 0.07)], dtype=jnp.float32)

    logits, loss = muscall_forward(logit_scale, audio_feat, text_feat,
                                   w_audio, w_text)
    jax.block_until_ready((logits, loss))

    # tight check vs. a reference with the kernel's declared precision policy
    ref_logits, ref_loss = muscall_reference_mixed(
        logit_scale, audio_feat, text_feat, w_audio, w_text)
    np.testing.assert_allclose(np.asarray(logits), np.asarray(ref_logits),
                               rtol=1e-4, atol=1e-3)
    np.testing.assert_allclose(float(loss[0, 0]), float(ref_loss),
                               rtol=1e-4, atol=1e-3)

    # loose check vs. the exact f32 PyTorch-equivalent math
    f32_logits, f32_loss = muscall_reference_f32(
        logit_scale, audio_feat, text_feat, w_audio, w_text)
    np.testing.assert_allclose(np.asarray(logits), np.asarray(f32_logits),
                               rtol=5e-2, atol=5e-2)
    np.testing.assert_allclose(float(loss[0, 0]), float(f32_loss),
                               rtol=5e-2, atol=5e-2)

    print("KERNEL_OK")
</pallas_src>

<mosaic_0001>
module attributes {stable_mosaic.version = 11 : i64} {
  func.func @muscall_kernel(%arg0: i32, %arg1: memref<1xf32, #tpu.memory_space<smem>>, %arg2: memref<8x128xbf16, #tpu.memory_space<vmem>>, %arg3: memref<8x128xbf16, #tpu.memory_space<vmem>>, %arg4: memref<128x128xbf16, #tpu.memory_space<vmem>>, %arg5: memref<128x128xbf16, #tpu.memory_space<vmem>>, %arg6: memref<8x8xf32, #tpu.memory_space<vmem>>, %arg7: memref<1x1xf32, #tpu.memory_space<vmem>>, %arg8: memref<8x128xbf16, #tpu.memory_space<vmem>>, %arg9: memref<8x128xf32, #tpu.memory_space<vmem>>, %arg10: memref<1x8xf32, #tpu.memory_space<vmem>>, %arg11: memref<1x8xf32, #tpu.memory_space<vmem>>, %arg12: memref<1x1xf32, #tpu.memory_space<vmem>>, %arg13: memref<1x1xf32, #tpu.memory_space<vmem>>) attributes {dimension_semantics = [#tpu.dimension_semantics<arbitrary>], iteration_bounds = array<i64: 1>, scalar_prefetch = 0 : i64, scratch_operands = 6 : i64, tpu.core_type = #tpu.core_type<tc>, window_params = [{transform_indices = @transform_0, window_bounds = array<i64: 1>}, {transform_indices = @transform_1, window_bounds = array<i64: 8, 128>}, {pipeline_mode = #tpu.pipeline_mode<synchronous>, transform_indices = @transform_2, window_bounds = array<i64: 8, 128>}, {pipeline_mode = #tpu.pipeline_mode<synchronous>, transform_indices = @transform_3, window_bounds = array<i64: 128, 128>}, {pipeline_mode = #tpu.pipeline_mode<synchronous>, transform_indices = @transform_4, window_bounds = array<i64: 128, 128>}, {transform_indices = @transform_5, window_bounds = array<i64: 8, 8>}, {pipeline_mode = #tpu.pipeline_mode<synchronous>, transform_indices = @transform_6, window_bounds = array<i64: 1, 1>}]} {
    %c0 = arith.constant 0 : index
    %0 = memref.load %arg1[%c0] : memref<1xf32, #tpu.memory_space<smem>>
    %1 = math.exp %0 : f32
    %c0_i32 = arith.constant 0 : i32
    %2 = arith.cmpi eq, %arg0, %c0_i32 : i32
    %3 = arith.extui %2 : i1 to i32
    %c0_i32_0 = arith.constant 0 : i32
    %4 = arith.cmpi ne, %3, %c0_i32_0 : i32
    scf.if %4 {
      %c0_39 = arith.constant 0 : index
      %c0_40 = arith.constant 0 : index
      %68 = vector.load %arg3[%c0_39, %c0_40] : memref<8x128xbf16, #tpu.memory_space<vmem>>, vector<8x128xbf16>
      %c0_41 = arith.constant 0 : index
      %c0_42 = arith.constant 0 : index
      %69 = vector.load %arg5[%c0_41, %c0_42] : memref<128x128xbf16, #tpu.memory_space<vmem>>, vector<128x128xbf16>
      %cst_43 = arith.constant dense<0.000000e+00> : vector<8x128xf32>
      %70 = tpu.matmul %68, %69, %cst_43 {dimension_numbers = #tpu.dot_dimension_numbers<[1], [0], [0], [1], [0, 0, 1, 1], [], []>} : vector<8x128xbf16>, vector<128x128xbf16>, vector<8x128xf32> -> vector<8x128xf32>
      %71 = arith.mulf %70, %70 : vector<8x128xf32>
      %cst_44 = arith.constant dense<0.000000e+00> : vector<8xf32>
      %72 = vector.multi_reduction <add>, %71, %cst_44 [1] : vector<8x128xf32> to vector<8xf32>
      %73 = vector.shape_cast %72 : vector<8xf32> to vector<8x1xf32>
      %74 = math.rsqrt %73 : vector<8x1xf32>
      %75 = vector.broadcast %74 : vector<8x1xf32> to vector<8x128xf32>
      %76 = arith.mulf %70, %75 : vector<8x128xf32>
      %77 = arith.truncf %76 : vector<8x128xf32> to vector<8x128xbf16>
      %c0_45 = arith.constant 0 : index
      %c0_46 = arith.constant 0 : index
      %78 = vector.load %arg8[%c0_45, %c0_46] : memref<8x128xbf16, #tpu.memory_space<vmem>>, vector<8x128xbf16>
      tpu.vector_store %arg8[%c0_45, %c0_46], %77 {strides = array<i32>} : memref<8x128xbf16, #tpu.memory_space<vmem>>, vector<8x128xbf16>,
      %79 = arith.extf %77 : vector<8x128xbf16> to vector<8x128xf32>
      %c0_47 = arith.constant 0 : index
      %c0_48 = arith.constant 0 : index
      %80 = vector.load %arg9[%c0_47, %c0_48] : memref<8x128xf32, #tpu.memory_space<vmem>>, vector<8x128xf32>
      tpu.vector_store %arg9[%c0_47, %c0_48], %79 {strides = array<i32>} : memref<8x128xf32, #tpu.memory_space<vmem>>, vector<8x128xf32>,
      %cst_49 = arith.constant 0xFF800000 : f32
      %81 = vector.broadcast %cst_49 : f32 to vector<1x8xf32>
      %c0_50 = arith.constant 0 : index
      %c0_51 = arith.constant 0 : index
      %82 = vector.load %arg10[%c0_50, %c0_51] : memref<1x8xf32, #tpu.memory_space<vmem>>, vector<1x8xf32>
      tpu.vector_store %arg10[%c0_50, %c0_51], %81 {strides = array<i32>} : memref<1x8xf32, #tpu.memory_space<vmem>>, vector<1x8xf32>,
      %cst_52 = arith.constant 0.000000e+00 : f32
      %83 = vector.broadcast %cst_52 : f32 to vector<1x8xf32>
      %c0_53 = arith.constant 0 : index
      %c0_54 = arith.constant 0 : index
      %84 = vector.load %arg11[%c0_53, %c0_54] : memref<1x8xf32, #tpu.memory_space<vmem>>, vector<1x8xf32>
      tpu.vector_store %arg11[%c0_53, %c0_54], %83 {strides = array<i32>} : memref<1x8xf32, #tpu.memory_space<vmem>>, vector<1x8xf32>,
      %cst_55 = arith.constant 0.000000e+00 : f32
      %85 = vector.broadcast %cst_55 : f32 to vector<1x1xf32>
      %c0_56 = arith.constant 0 : index
      %c0_57 = arith.constant 0 : index
      %86 = vector.load %arg12[%c0_56, %c0_57] : memref<1x1xf32, #tpu.memory_space<vmem>>, vector<1x1xf32>
      tpu.vector_store %arg12[%c0_56, %c0_57], %85 {strides = array<i32>} : memref<1x1xf32, #tpu.memory_space<vmem>>, vector<1x1xf32>,
      %cst_58 = arith.constant 0.000000e+00 : f32
      %87 = vector.broadcast %cst_58 : f32 to vector<1x1xf32>
      %c0_59 = arith.constant 0 : index
      %c0_60 = arith.constant 0 : index
      %88 = vector.load %arg13[%c0_59, %c0_60] : memref<1x1xf32, #tpu.memory_space<vmem>>, vector<1x1xf32>
      tpu.vector_store %arg13[%c0_59, %c0_60], %87 {strides = array<i32>} : memref<1x1xf32, #tpu.memory_space<vmem>>, vector<1x1xf32>,
    } else {
    }
    %c0_1 = arith.constant 0 : index
    %c0_2 = arith.constant 0 : index
    %5 = vector.load %arg2[%c0_1, %c0_2] : memref<8x128xbf16, #tpu.memory_space<vmem>>, vector<8x128xbf16>
    %c0_3 = arith.constant 0 : index
    %c0_4 = arith.constant 0 : index
    %6 = vector.load %arg4[%c0_3, %c0_4] : memref<128x128xbf16, #tpu.memory_space<vmem>>, vector<128x128xbf16>
    %cst = arith.constant dense<0.000000e+00> : vector<8x128xf32>
    %7 = tpu.matmul %5, %6, %cst {dimension_numbers = #tpu.dot_dimension_numbers<[1], [0], [0], [1], [0, 0, 1, 1], [], []>} : vector<8x128xbf16>, vector<128x128xbf16>, vector<8x128xf32> -> vector<8x128xf32>
    %8 = arith.mulf %7, %7 : vector<8x128xf32>
    %cst_5 = arith.constant dense<0.000000e+00> : vector<8xf32>
    %9 = vector.multi_reduction <add>, %8, %cst_5 [1] : vector<8x128xf32> to vector<8xf32>
    %10 = vector.shape_cast %9 : vector<8xf32> to vector<8x1xf32>
    %11 = math.rsqrt %10 : vector<8x1xf32>
    %12 = vector.broadcast %1 : f32 to vector<8x1xf32>
    %13 = arith.mulf %12, %11 : vector<8x1xf32>
    %14 = vector.broadcast %13 : vector<8x1xf32> to vector<8x128xf32>
    %15 = arith.mulf %7, %14 : vector<8x128xf32>
    %16 = arith.truncf %15 : vector<8x128xf32> to vector<8x128xbf16>
    %c0_6 = arith.constant 0 : index
    %c0_7 = arith.constant 0 : index
    %17 = vector.load %arg8[%c0_6, %c0_7] : memref<8x128xbf16, #tpu.memory_space<vmem>>, vector<8x128xbf16>
    %cst_8 = arith.constant dense<0.000000e+00> : vector<8x8xf32>
    %18 = tpu.matmul %16, %17, %cst_8 {dimension_numbers = #tpu.dot_dimension_numbers<[1], [1], [0], [0], [0, 0, 1, 0], [], []>} : vector<8x128xbf16>, vector<8x128xbf16>, vector<8x8xf32> -> vector<8x8xf32>
    %c0_9 = arith.constant 0 : index
    %c0_10 = arith.constant 0 : index
    %19 = vector.load %arg6[%c0_9, %c0_10] : memref<8x8xf32, #tpu.memory_space<vmem>>, vector<8x8xf32>
    tpu.vector_store %arg6[%c0_9, %c0_10], %18 {strides = array<i32>} : memref<8x8xf32, #tpu.memory_space<vmem>>, vector<8x8xf32>,
    %c8_i32 = arith.constant 8 : i32
    %20 = arith.muli %arg0, %c8_i32 : i32
    %21 = tpu.assume_multiple %20, 8 : i32
    %22 = arith.index_cast %21 : i32 to index
    %c0_11 = arith.constant 0 : index
    %23 = vector.load %arg9[%22, %c0_11] : memref<8x128xf32, #tpu.memory_space<vmem>>, vector<8x128xf32>
    %24 = arith.extf %16 : vector<8x128xbf16> to vector<8x128xf32>
    %25 = arith.mulf %24, %23 : vector<8x128xf32>
    %cst_12 = arith.constant dense<0.000000e+00> : vector<8xf32>
    %26 = vector.multi_reduction <add>, %25, %cst_12 [1] : vector<8x128xf32> to vector<8xf32>
    %27 = vector.shape_cast %26 : vector<8xf32> to vector<8x1xf32>
    %cst_13 = arith.constant dense<0xFF800000> : vector<8xf32>
    %28 = vector.multi_reduction <maximumf>, %18, %cst_13 [1] : vector<8x8xf32> to vector<8xf32>
    %29 = vector.shape_cast %28 : vector<8xf32> to vector<8x1xf32>
    %30 = vector.broadcast %29 : vector<8x1xf32> to vector<8x8xf32>
    %31 = arith.subf %18, %30 : vector<8x8xf32>
    %32 = math.exp %31 : vector<8x8xf32>
    %cst_14 = arith.constant dense<0.000000e+00> : vector<8xf32>
    %33 = vector.multi_reduction <add>, %32, %cst_14 [1] : vector<8x8xf32> to vector<8xf32>
    %34 = vector.shape_cast %33 : vector<8xf32> to vector<8x1xf32>
    %35 = math.log %34 : vector<8x1xf32>
    %36 = arith.addf %35, %29 : vector<8x1xf32>
    %c0_15 = arith.constant 0 : index
    %c0_16 = arith.constant 0 : index
    %37 = vector.load %arg12[%c0_15, %c0_16] : memref<1x1xf32, #tpu.memory_space<vmem>>, vector<1x1xf32>
    %38 = arith.subf %36, %27 : vector<8x1xf32>
    %cst_17 = arith.constant dense<0.000000e+00> : vector<1xf32>
    %39 = vector.multi_reduction <add>, %38, %cst_17 [0] : vector<8x1xf32> to vector<1xf32>
    %40 = vector.shape_cast %39 : vector<1xf32> to vector<1x1xf32>
    %41 = arith.addf %37, %40 : vector<1x1xf32>
    %c0_18 = arith.constant 0 : index
    %c0_19 = arith.constant 0 : index
    %42 = vector.load %arg12[%c0_18, %c0_19] : memref<1x1xf32, #tpu.memory_space<vmem>>, vector<1x1xf32>
    tpu.vector_store %arg12[%c0_18, %c0_19], %41 {strides = array<i32>} : memref<1x1xf32, #tpu.memory_space<vmem>>, vector<1x1xf32>,
    %c0_20 = arith.constant 0 : index
    %c0_21 = arith.constant 0 : index
    %43 = vector.load %arg13[%c0_20, %c0_21] : memref<1x1xf32, #tpu.memory_space<vmem>>, vector<1x1xf32>
    %cst_22 = arith.constant dense<0.000000e+00> : vector<1xf32>
    %44 = vector.multi_reduction <add>, %27, %cst_22 [0] : vector<8x1xf32> to vector<1xf32>
    %45 = vector.shape_cast %44 : vector<1xf32> to vector<1x1xf32>
    %46 = arith.addf %43, %45 : vector<1x1xf32>
    %c0_23 = arith.constant 0 : index
    %c0_24 = arith.constant 0 : index
    %47 = vector.load %arg13[%c0_23, %c0_24] : memref<1x1xf32, #tpu.memory_space<vmem>>, vector<1x1xf32>
    tpu.vector_store %arg13[%c0_23, %c0_24], %46 {strides = array<i32>} : memref<1x1xf32, #tpu.memory_space<vmem>>, vector<1x1xf32>,
    %cst_25 = arith.constant dense<0xFF800000> : vector<8xf32>
    %48 = vector.multi_reduction <maximumf>, %18, %cst_25 [0] : vector<8x8xf32> to vector<8xf32>
    %49 = vector.shape_cast %48 : vector<8xf32> to vector<1x8xf32>
    %c0_26 = arith.constant 0 : index
    %c0_27 = arith.constant 0 : index
    %50 = vector.load %arg10[%c0_26, %c0_27] : memref<1x8xf32, #tpu.memory_space<vmem>>, vector<1x8xf32>
    %51 = arith.maximumf %50, %49 : vector<1x8xf32>
    %c0_28 = arith.constant 0 : index
    %c0_29 = arith.constant 0 : index
    %52 = vector.load %arg11[%c0_28, %c0_29] : memref<1x8xf32, #tpu.memory_space<vmem>>, vector<1x8xf32>
    %c0_30 = arith.constant 0 : index
    %c0_31 = arith.constant 0 : index
    %53 = vector.load %arg10[%c0_30, %c0_31] : memref<1x8xf32, #tpu.memory_space<vmem>>, vector<1x8xf32>
    %54 = arith.subf %53, %51 : vector<1x8xf32>
    %55 = math.exp %54 : vector<1x8xf32>
    %56 = arith.mulf %52, %55 : vector<1x8xf32>
    %57 = vector.broadcast %51 : vector<1x8xf32> to vector<8x8xf32>
    %58 = arith.subf %18, %57 : vector<8x8xf32>
    %59 = math.exp %58 : vector<8x8xf32>
    %cst_32 = arith.constant dense<0.000000e+00> : vector<8xf32>
    %60 = vector.multi_reduction <add>, %59, %cst_32 [0] : vector<8x8xf32> to vector<8xf32>
    %61 = vector.shape_cast %60 : vector<8xf32> to vector<1x8xf32>
    %62 = arith.addf %56, %61 : vector<1x8xf32>
    %c0_33 = arith.constant 0 : index
    %c0_34 = arith.constant 0 : index
    %63 = vector.load %arg11[%c0_33, %c0_34] : memref<1x8xf32, #tpu.memory_space<vmem>>, vector<1x8xf32>
    tpu.vector_store %arg11[%c0_33, %c0_34], %62 {strides = array<i32>} : memref<1x8xf32, #tpu.memory_space<vmem>>, vector<1x8xf32>,
    %c0_35 = arith.constant 0 : index
    %c0_36 = arith.constant 0 : index
    %64 = vector.load %arg10[%c0_35, %c0_36] : memref<1x8xf32, #tpu.memory_space<vmem>>, vector<1x8xf32>
    tpu.vector_store %arg10[%c0_35, %c0_36], %51 {strides = array<i32>} : memref<1x8xf32, #tpu.memory_space<vmem>>, vector<1x8xf32>,
    %c0_i32_37 = arith.constant 0 : i32
    %65 = arith.cmpi eq, %arg0, %c0_i32_37 : i32
    %66 = arith.extui %65 : i1 to i32
    %c0_i32_38 = arith.constant 0 : i32
    %67 = arith.cmpi ne, %66, %c0_i32_38 : i32
    scf.if %67 {
      %c0_39 = arith.constant 0 : index
      %c0_40 = arith.constant 0 : index
      %68 = vector.load %arg11[%c0_39, %c0_40] : memref<1x8xf32, #tpu.memory_space<vmem>>, vector<1x8xf32>
      %69 = math.log %68 : vector<1x8xf32>
      %c0_41 = arith.constant 0 : index
      %c0_42 = arith.constant 0 : index
      %70 = vector.load %arg10[%c0_41, %c0_42] : memref<1x8xf32, #tpu.memory_space<vmem>>, vector<1x8xf32>
      %71 = arith.addf %69, %70 : vector<1x8xf32>
      %cst_43 = arith.constant dense<0.000000e+00> : vector<1xf32>
      %72 = vector.multi_reduction <add>, %71, %cst_43 [1] : vector<1x8xf32> to vector<1xf32>
      %73 = vector.shape_cast %72 : vector<1xf32> to vector<1x1xf32>
      %c0_44 = arith.constant 0 : index
      %c0_45 = arith.constant 0 : index
      %74 = vector.load %arg13[%c0_44, %c0_45] : memref<1x1xf32, #tpu.memory_space<vmem>>, vector<1x1xf32>
      %75 = arith.subf %73, %74 : vector<1x1xf32>
      %c0_46 = arith.constant 0 : index
      %c0_47 = arith.constant 0 : index
      %76 = vector.load %arg12[%c0_46, %c0_47] : memref<1x1xf32, #tpu.memory_space<vmem>>, vector<1x1xf32>
      %77 = arith.addf %75, %76 : vector<1x1xf32>
      %cst_48 = arith.constant 6.250000e-02 : f32
      %78 = vector.broadcast %cst_48 : f32 to vector<1x1xf32>
      %79 = arith.mulf %77, %78 : vector<1x1xf32>
      %c0_49 = arith.constant 0 : index
      %c0_50 = arith.constant 0 : index
      %80 = vector.load %arg7[%c0_49, %c0_50] : memref<1x1xf32, #tpu.memory_space<vmem>>, vector<1x1xf32>
      tpu.vector_store %arg7[%c0_49, %c0_50], %79 {strides = array<i32>} : memref<1x1xf32, #tpu.memory_space<vmem>>, vector<1x1xf32>,
    } else {
    }
    return
  }
  func.func @transform_0(%arg0: i32) -> i32 {
    %c0_i32 = arith.constant 0 : i32
    %c0_i32_0 = arith.constant 0 : i32
    return %c0_i32 : i32
  }
  func.func @transform_1(%arg0: i32) -> (i32, i32) {
    %c0_i32 = arith.constant 0 : i32
    %c0_i32_0 = arith.constant 0 : i32
    return %arg0, %c0_i32 : i32, i32
  }
  func.func @transform_2(%arg0: i32) -> (i32, i32) {
    %c0_i32 = arith.constant 0 : i32
    %c0_i32_0 = arith.constant 0 : i32
    %c0_i32_1 = arith.constant 0 : i32
    return %c0_i32, %c0_i32_0 : i32, i32
  }
  func.func @transform_3(%arg0: i32) -> (i32, i32) {
    %c0_i32 = arith.constant 0 : i32
    %c0_i32_0 = arith.constant 0 : i32
    %c0_i32_1 = arith.constant 0 : i32
    return %c0_i32, %c0_i32_0 : i32, i32
  }
  func.func @transform_4(%arg0: i32) -> (i32, i32) {
    %c0_i32 = arith.constant 0 : i32
    %c0_i32_0 = arith.constant 0 : i32
    %c0_i32_1 = arith.constant 0 : i32
    return %c0_i32, %c0_i32_0 : i32, i32
  }
  func.func @transform_5(%arg0: i32) -> (i32, i32) {
    %c0_i32 = arith.constant 0 : i32
    %c0_i32_0 = arith.constant 0 : i32
    return %arg0, %c0_i32 : i32, i32
  }
  func.func @transform_6(%arg0: i32) -> (i32, i32) {
    %c0_i32 = arith.constant 0 : i32
    %c0_i32_0 = arith.constant 0 : i32
    %c0_i32_1 = arith.constant 0 : i32
    return %c0_i32, %c0_i32_0 : i32, i32
  }
}

</mosaic_0001>

<llo_original>
// kernel: tpu_custom_call.1
$region0: #{tpu_custom_call.1}
  #allocation0 [shape = 'u32[]', space=smem, size = 0x4, offset = 0x4, fixed_abs, tag = 'smem constant byte address 0x4 - core index']
  #allocation1 [shape = 'u32[144,128]{1,0:T(1,128)}', space=vmem, size = 0x12000, scoped, tag = 'internal scratch']
  #allocation2 [shape = 'bf16[8,128]{1,0:T(8,128)(2,1)}', space=vmem, size = 0x800, scoped, tag = 'scratch operand']
  #allocation3 [shape = 'f32[8,128]{1,0:T(8,128)}', space=vmem, size = 0x1000, scoped, tag = 'scratch operand']
  #allocation4 [shape = 'f32[1,8]{1,0:T(1,128)}', space=vmem, size = 0x200, scoped, tag = 'scratch operand']
  #allocation5 [shape = 'f32[1,8]{1,0:T(1,128)}', space=vmem, size = 0x200, scoped, tag = 'scratch operand']
  #allocation6 [shape = 'f32[1,1]{1,0:T(1,128)}', space=vmem, size = 0x200, scoped, tag = 'scratch operand']
  #allocation7 [shape = 'f32[1,1]{1,0:T(1,128)}', space=vmem, size = 0x200, scoped, tag = 'scratch operand']
  #allocation8 [shape = 'f32[1]{0:T(128)S(6)}', space=smem, size = 0x200, scoped, tag = 'scoped memory for tpu_custom_call.1']
  %s0 = inlined_call_operand.<no memory space> [shape: f32[1], index: 0, kind: input, shape index: {}]
  %s1 = inlined_call_operand.hbm [shape: bf16[8,128], index: 1, kind: input, shape index: {}]
  %s2 = inlined_call_operand.vmem [shape: bf16[8,128], index: 2, kind: input, shape index: {}]
  %s3 = inlined_call_operand.hbm [shape: bf16[128,128], index: 3, kind: input, shape index: {}]
  %s4 = inlined_call_operand.hbm [shape: bf16[128,128], index: 4, kind: input, shape index: {}]
  %s5 = inlined_call_operand.hbm [shape: f32[8,8], index: 5, kind: output, shape index: {0}]
  %s6 = inlined_call_operand.hbm [shape: f32[1,1], index: 6, kind: output, shape index: {1}]
  %7 = xla_tuple %s5, %s6
  %s8 = sld [smem:[#allocation0]]
  $region58: #{tpu_custom_call.1} parent=0
    _
  %s10 = ssub.s32 1, %s8
  %s11 = scalar_select 0, %s10, %s8
  %12 = sst [smem:[#allocation8]] %s0
  $region1: #{tpu_custom_call.1} parent=0
    #allocation9 [shape = 'u8[2048]{0}', space=vmem, size = 0x800, scoped, tag = 'input window, operand 1, single buffered']
    #allocation10 [shape = 's32[1]{0}', space=sflag, size = 0x4, scoped, tag = 'scoped memory for tpu_custom_call.1']
    #allocation11 [shape = 's32[1]{0}', space=sflag, size = 0x4, scoped, tag = 'scoped memory for tpu_custom_call.1']
    #allocation12 [shape = 'u8[32768]{0}', space=vmem, size = 0x8000, scoped, tag = 'input window, operand 3, single buffered']
    #allocation13 [shape = 's32[1]{0}', space=sflag, size = 0x4, scoped, tag = 'scoped memory for tpu_custom_call.1']
    #allocation14 [shape = 'u8[32768]{0}', space=vmem, size = 0x8000, scoped, tag = 'input window, operand 4, single buffered']
    #allocation15 [shape = 'u8[4096]{0}', space=vmem, size = 0x1000, scoped, tag = 'output window, operand 0, single buffered']
    #allocation16 [shape = 'u8[512]{0}', space=vmem, size = 0x400, scoped, tag = 'output window, operand 1, single buffered']
    #allocation17 [shape = 's32[1]{0}', space=sflag, size = 0x4, scoped, tag = 'scoped memory for tpu_custom_call.1']
    %13 = vsyncpa [#allocation10], 0
    %14 = vsyncpa [#allocation13], 0
    %15 = vsyncpa [#allocation11], 0
    %16 = vsyncpa [#allocation17], 0
    // Predicated region
    $region2: #{tpu_custom_call.1} parent=1 // pred_check
      _
    $region3: #{tpu_custom_call.1} parent=1 // pred_check_branch
      %18 = sbr.rel (0) target = $region5
    $region4: #{tpu_custom_call.1} parent=1 // pred_region
      _
    $region5: #{tpu_custom_call.1} parent=1 // pred_fallthru
      _
    // Predicated region
    $region6: #{tpu_custom_call.1} parent=1 // pred_check
      _
    $region7: #{tpu_custom_call.1} parent=1 // pred_check_branch
      %20 = sbr.rel (0) target = $region9
    $region8: #{tpu_custom_call.1} parent=1 // pred_region
      %s22 = ssub.s32 64, 64
      %23 = vsyncadd [#allocation10], %s22
      %s25 = sshll.u32 [#allocation9], 4
      %s26 = int_to_ptr.vmem [resolvable:$true] %s25
      %28 = dma.hbm_to_vmem [thread:$0]  %s1, 64, %s26, [#allocation10]
    $region9: #{tpu_custom_call.1} parent=1 // pred_fallthru
      _
    // Predicated region
    $region10: #{tpu_custom_call.1} parent=1 // pred_check
      _
    $region11: #{tpu_custom_call.1} parent=1 // pred_check_branch
      %30 = sbr.rel (0) target = $region13
    $region12: #{tpu_custom_call.1} parent=1 // pred_region
      _
    $region13: #{tpu_custom_call.1} parent=1 // pred_fallthru
      _
    // Predicated region
    $region14: #{tpu_custom_call.1} parent=1 // pred_check
      _
    $region15: #{tpu_custom_call.1} parent=1 // pred_check_branch
      %32 = sbr.rel (0) target = $region17
    $region16: #{tpu_custom_call.1} parent=1 // pred_region
      %s34 = ssub.s32 1024, 1024
      %35 = vsyncadd [#allocation13], %s34
      %s36 = sshll.u32 [#allocation12], 4
      %s37 = int_to_ptr.vmem [resolvable:$true] %s36
      %42 = dma.hbm_to_vmem [thread:$0]  %s3, 1024, %s37, [#allocation13], 64, 64, 4
    $region17: #{tpu_custom_call.1} parent=1 // pred_fallthru
      _
    // Predicated region
    $region18: #{tpu_custom_call.1} parent=1 // pred_check
      _
    $region19: #{tpu_custom_call.1} parent=1 // pred_check_branch
      %44 = sbr.rel (0) target = $region21
    $region20: #{tpu_custom_call.1} parent=1 // pred_region
      %s46 = ssub.s32 1024, 1024
      %47 = vsyncadd [#allocation13], %s46
      %s48 = sshll.u32 [#allocation14], 4
      %s49 = int_to_ptr.vmem [resolvable:$true] %s48
      %54 = dma.hbm_to_vmem [thread:$0]  %s4, 1024, %s49, [#allocation13], 64, 64, 4
    $region21: #{tpu_custom_call.1} parent=1 // pred_fallthru
      _
    // Predicated region
    $region22: #{tpu_custom_call.1} parent=1 // pred_check
      _
    $region23: #{tpu_custom_call.1} parent=1 // pred_check_branch
      %56 = sbr.rel (0) target = $region25
    $region24: #{tpu_custom_call.1} parent=1 // pred_region
      %57 = dma.done [#allocation10], 64
    $region25: #{tpu_custom_call.1} parent=1 // pred_fallthru
      _
    // Predicated region
    $region26: #{tpu_custom_call.1} parent=1 // pred_check
      _
    $region27: #{tpu_custom_call.1} parent=1 // pred_check_branch
      %59 = sbr.rel (0) target = $region29
    $region28: #{tpu_custom_call.1} parent=1 // pred_region
      %60 = dma.done [#allocation13], 1024
    $region29: #{tpu_custom_call.1} parent=1 // pred_fallthru
      _
    // Predicated region
    $region30: #{tpu_custom_call.1} parent=1 // pred_check
      _
    $region31: #{tpu_custom_call.1} parent=1 // pred_check_branch
      %62 = sbr.rel (0) target = $region33
    $region32: #{tpu_custom_call.1} parent=1 // pred_region
      %63 = dma.done [#allocation13], 1024
    $region33: #{tpu_custom_call.1} parent=1 // pred_fallthru
      _
    %s65 = sld [smem:[#allocation8]]
    %v66 = vstv %s65
    %v67 = vmul.f32 %v66, 1.442695
    %v68 = vpow.pop %v67
    %s69 = vtos %v68
    %p70 = scmp.eq.s32.totalorder 0, 0
    // Predicated region
    $region34: #{tpu_custom_call.1} parent=1 // pred_check
      %p71 = pneg %p70
    $region35: #{tpu_custom_call.1} parent=1 // pred_check_branch
      %73 = sbr.rel (%p71) target = $region37
    $region36: #{tpu_custom_call.1} parent=1 // pred_region
      %v74 = vld [vmem:[%s2] sm:$0xf]
      %v75 = vld [vmem:[#allocation14] sm:$0xf]
      %v76 = vld [vmem:[#allocation14 + $0x4] sm:$0xf]
      %v77 = vld [vmem:[#allocation14 + $0x8] sm:$0xf]
      %v78 = vld [vmem:[#allocation14 + $0xc] sm:$0xf]
      %v79 = vld [vmem:[#allocation14 + $0x10] sm:$0xf]
      %v80 = vld [vmem:[#allocation14 + $0x14] sm:$0xf]
      %v81 = vld [vmem:[#allocation14 + $0x18] sm:$0xf]
      %v82 = vld [vmem:[#allocation14 + $0x1c] sm:$0xf]
      %v83 = vld [vmem:[#allocation14 + $0x20] sm:$0xf]
      %v84 = vld [vmem:[#allocation14 + $0x24] sm:$0xf]
      %v85 = vld [vmem:[#allocation14 + $0x28] sm:$0xf]
      %v86 = vld [vmem:[#allocation14 + $0x2c] sm:$0xf]
      %v87 = vld [vmem:[#allocation14 + $0x30] sm:$0xf]
      %v88 = vld [vmem:[#allocation14 + $0x34] sm:$0xf]
      %v89 = vld [vmem:[#allocation14 + $0x38] sm:$0xf]
      %v90 = vld [vmem:[#allocation14 + $0x3c] sm:$0xf]
      %v107 = vunpack.c.l.b16 %v75
      %v108 = vunpack.c.l.b16 %v76
      %v109 = vunpack.c.l.b16 %v77
      %v110 = vunpack.c.l.b16 %v78
      %v111 = vunpack.c.l.b16 %v79
      %v112 = vunpack.c.l.b16 %v80
      %v113 = vunpack.c.l.b16 %v81
      %v114 = vunpack.c.l.b16 %v82
      %v115 = vunpack.c.l.b16 %v83
      %v116 = vunpack.c.l.b16 %v84
      %v117 = vunpack.c.l.b16 %v85
      %v118 = vunpack.c.l.b16 %v86
      %v119 = vunpack.c.l.b16 %v87
      %v120 = vunpack.c.l.b16 %v88
      %v121 = vunpack.c.l.b16 %v89
      %v122 = vunpack.c.l.b16 %v90
      %v123 = vpack.c.b16 %v108, %v107
      %v124 = vpack.c.b16 %v110, %v109
      %v125 = vpack.c.b16 %v112, %v111
      %v126 = vpack.c.b16 %v114, %v113
      %v127 = vpack.c.b16 %v116, %v115
      %v128 = vpack.c.b16 %v118, %v117
      %v129 = vpack.c.b16 %v120, %v119
      %v130 = vpack.c.b16 %v122, %v121
      %139 = vmatprep.subr.bf16.mxu0 0
      %140 = vmatpush1.bf16.msra.mxu0 %v123
      %141 = vmatprep.subr.bf16.mxu0 0
      %142 = vmatpush1.bf16.msra.mxu0 %v124
      %143 = vmatprep.subr.bf16.mxu0 0
      %144 = vmatpush1.bf16.msra.mxu0 %v125
      %145 = vmatprep.subr.bf16.mxu0 0
      %146 = vmatpush1.bf16.msra.mxu0 %v126
      %147 = vmatprep.subr.bf16.mxu0 0
      %148 = vmatpush1.bf16.msra.mxu0 %v127
      %149 = vmatprep.subr.bf16.mxu0 0
      %150 = vmatpush1.bf16.msra.mxu0 %v128
      %151 = vmatprep.subr.bf16.mxu0 0
      %152 = vmatpush1.bf16.msra.mxu0 %v129
      %153 = vmatprep.subr.bf16.mxu0 0
      %154 = vmatpush1.bf16.msra.mxu0 %v130
      %155 = vmatprep.subr.bf16.mxu0 0
      %156 = vmatpush1.bf16.msra.mxu0 0
      %157 = vmatprep.subr.bf16.mxu0 0
      %158 = vmatpush1.bf16.msra.mxu0 0
      %159 = vmatprep.subr.bf16.mxu0 0
      %160 = vmatpush1.bf16.msra.mxu0 0
      %161 = vmatprep.subr.bf16.mxu0 0
      %162 = vmatpush1.bf16.msra.mxu0 0
      %163 = vmatprep.subr.bf16.mxu0 0
      %164 = vmatpush1.bf16.msra.mxu0 0
      %165 = vmatprep.subr.bf16.mxu0 0
      %166 = vmatpush1.bf16.msra.mxu0 0
      %167 = vmatprep.subr.bf16.mxu0 0
      %168 = vmatpush1.bf16.msra.mxu0 0
      %169 = vmatprep.subr.bf16.mxu0 0
      %170 = vmatpush1.bf16.msra.mxu0 0
      %171 = vmatprep.mubr.bf16.mxu0 0
      %172 = vmatmul.mubr.bf16.gmra.mrb[0].mxu0 %v74
      %v173 = vpop.f32.mrb[0].mxu0
      %v174 = vadd.f32 0.0, %v173
      %v175 = vpop.f32.mrb[0].mxu0
      %v176 = vpop.f32.mrb[0].mxu0
      %v177 = vpop.f32.mrb[0].mxu0
      %178 = vdwg.mxu0
      %v179 = vmul.f32 %v174, %v174
      %180 = vadd.xlane.f32.xlu0 %v179
      %v181 = vpop.xlane.xlu0 %180
      %v182 = vrsqrt.pop %v181
      %v183 = vmul.f32 %v174, %v182
      %v184 = vpack.c.bf16 %v183, %v183
      %185 = vst [vmem:[#allocation2] sm:$0xf] %v184
      %v186 = vunpack.c.l.bf16 %v184
      %187 = vst [vmem:[#allocation3] sm:$0xff] %v186
      %vm188 = vcmask 57344
      %189 = vst.msk [vmem:[#allocation4] sm:$0x1] %vm188, -inf
      %190 = vst.msk [vmem:[#allocation5] sm:$0x1] %vm188, 0.0
      %vm191 = vcmask 0
      %192 = vst.msk [vmem:[#allocation6] sm:$0x1] %vm191, 0.0
      %193 = vst.msk [vmem:[#allocation7] sm:$0x1] %vm191, 0.0
    $region37: #{tpu_custom_call.1} parent=1 // pred_fallthru
      _
    %v194 = vld [vmem:[#allocation9] sm:$0xf]
    %v195 = vld [vmem:[#allocation12] sm:$0xf]
    %v196 = vld [vmem:[#allocation12 + $0x4] sm:$0xf]
    %v197 = vld [vmem:[#allocation12 + $0x8] sm:$0xf]
    %v198 = vld [vmem:[#allocation12 + $0xc] sm:$0xf]
    %v199 = vld [vmem:[#allocation12 + $0x10] sm:$0xf]
    %v200 = vld [vmem:[#allocation12 + $0x14] sm:$0xf]
    %v201 = vld [vmem:[#allocation12 + $0x18] sm:$0xf]
    %v202 = vld [vmem:[#allocation12 + $0x1c] sm:$0xf]
    %v203 = vld [vmem:[#allocation12 + $0x20] sm:$0xf]
    %v204 = vld [vmem:[#allocation12 + $0x24] sm:$0xf]
    %v205 = vld [vmem:[#allocation12 + $0x28] sm:$0xf]
    %v206 = vld [vmem:[#allocation12 + $0x2c] sm:$0xf]
    %v207 = vld [vmem:[#allocation12 + $0x30] sm:$0xf]
    %v208 = vld [vmem:[#allocation12 + $0x34] sm:$0xf]
    %v209 = vld [vmem:[#allocation12 + $0x38] sm:$0xf]
    %v210 = vld [vmem:[#allocation12 + $0x3c] sm:$0xf]
    %v227 = vunpack.c.l.b16 %v195
    %v228 = vunpack.c.l.b16 %v196
    %v229 = vunpack.c.l.b16 %v197
    %v230 = vunpack.c.l.b16 %v198
    %v231 = vunpack.c.l.b16 %v199
    %v232 = vunpack.c.l.b16 %v200
    %v233 = vunpack.c.l.b16 %v201
    %v234 = vunpack.c.l.b16 %v202
    %v235 = vunpack.c.l.b16 %v203
    %v236 = vunpack.c.l.b16 %v204
    %v237 = vunpack.c.l.b16 %v205
    %v238 = vunpack.c.l.b16 %v206
    %v239 = vunpack.c.l.b16 %v207
    %v240 = vunpack.c.l.b16 %v208
    %v241 = vunpack.c.l.b16 %v209
    %v242 = vunpack.c.l.b16 %v210
    %v243 = vpack.c.b16 %v228, %v227
    %v244 = vpack.c.b16 %v230, %v229
    %v245 = vpack.c.b16 %v232, %v231
    %v246 = vpack.c.b16 %v234, %v233
    %v247 = vpack.c.b16 %v236, %v235
    %v248 = vpack.c.b16 %v238, %v237
    %v249 = vpack.c.b16 %v240, %v239
    %v250 = vpack.c.b16 %v242, %v241
    %259 = vmatprep.subr.bf16.mxu0 0
    %260 = vmatpush1.bf16.msra.mxu0 %v243
    %261 = vmatprep.subr.bf16.mxu0 0
    %262 = vmatpush1.bf16.msra.mxu0 %v244
    %263 = vmatprep.subr.bf16.mxu0 0
    %264 = vmatpush1.bf16.msra.mxu0 %v245
    %265 = vmatprep.subr.bf16.mxu0 0
    %266 = vmatpush1.bf16.msra.mxu0 %v246
    %267 = vmatprep.subr.bf16.mxu0 0
    %268 = vmatpush1.bf16.msra.mxu0 %v247
    %269 = vmatprep.subr.bf16.mxu0 0
    %270 = vmatpush1.bf16.msra.mxu0 %v248
    %271 = vmatprep.subr.bf16.mxu0 0
    %272 = vmatpush1.bf16.msra.mxu0 %v249
    %273 = vmatprep.subr.bf16.mxu0 0
    %274 = vmatpush1.bf16.msra.mxu0 %v250
    %275 = vmatprep.subr.bf16.mxu0 0
    %276 = vmatpush1.bf16.msra.mxu0 0
    %277 = vmatprep.subr.bf16.mxu0 0
    %278 = vmatpush1.bf16.msra.mxu0 0
    %279 = vmatprep.subr.bf16.mxu0 0
    %280 = vmatpush1.bf16.msra.mxu0 0
    %281 = vmatprep.subr.bf16.mxu0 0
    %282 = vmatpush1.bf16.msra.mxu0 0
    %283 = vmatprep.subr.bf16.mxu0 0
    %284 = vmatpush1.bf16.msra.mxu0 0
    %285 = vmatprep.subr.bf16.mxu0 0
    %286 = vmatpush1.bf16.msra.mxu0 0
    %287 = vmatprep.subr.bf16.mxu0 0
    %288 = vmatpush1.bf16.msra.mxu0 0
    %289 = vmatprep.subr.bf16.mxu0 0
    %290 = vmatpush1.bf16.msra.mxu0 0
    %291 = vmatprep.mubr.bf16.mxu0 0
    %292 = vmatmul.mubr.bf16.gmra.mrb[0].mxu0 %v194
    %v293 = vpop.f32.mrb[0].mxu0
    %v294 = vadd.f32 0.0, %v293
    %v295 = vpop.f32.mrb[0].mxu0
    %v296 = vpop.f32.mrb[0].mxu0
    %v297 = vpop.f32.mrb[0].mxu0
    %298 = vdwg.mxu0
    %v299 = vmul.f32 %v294, %v294
    %300 = vadd.xlane.f32.xlu0 %v299
    %v301 = vpop.xlane.xlu0 %300
    %v302 = vrsqrt.pop %v301
    %v303 = vstv %s69
    %v304 = vmul.f32 %v303, %v302
    %v305 = vmul.f32 %v294, %v304
    %v306 = vpack.c.bf16 %v305, %v305
    %v307 = vld [vmem:[#allocation2] sm:$0xf]
    %308 = vmatprep.subr.bf16.mxu0 0
    %309 = vmatpush1.bf16.xpose.msra.mxu0 %v307
    %310 = vmatprep.subr.bf16.mxu0 0
    %311 = vmatpush1.bf16.xpose.msra.mxu0 0
    %312 = vmatprep.subr.bf16.mxu0 0
    %313 = vmatpush1.bf16.xpose.msra.mxu0 0
    %314 = vmatprep.subr.bf16.mxu0 0
    %315 = vmatpush1.bf16.xpose.msra.mxu0 0
    %316 = vmatprep.subr.bf16.mxu0 0
    %317 = vmatpush1.bf16.xpose.msra.mxu0 0
    %318 = vmatprep.subr.bf16.mxu0 0
    %319 = vmatpush1.bf16.xpose.msra.mxu0 0
    %320 = vmatprep.subr.bf16.mxu0 0
    %321 = vmatpush1.bf16.xpose.msra.mxu0 0
    %322 = vmatprep.subr.bf16.mxu0 0
    %323 = vmatpush1.bf16.xpose.msra.mxu0 0
    %324 = vmatprep.subr.bf16.mxu0 0
    %325 = vmatpush1.bf16.xpose.msra.mxu0 0
    %326 = vmatprep.subr.bf16.mxu0 0
    %327 = vmatpush1.bf16.xpose.msra.mxu0 0
    %328 = vmatprep.subr.bf16.mxu0 0
    %329 = vmatpush1.bf16.xpose.msra.mxu0 0
    %330 = vmatprep.subr.bf16.mxu0 0
    %331 = vmatpush1.bf16.xpose.msra.mxu0 0
    %332 = vmatprep.subr.bf16.mxu0 0
    %333 = vmatpush1.bf16.xpose.msra.mxu0 0
    %334 = vmatprep.subr.bf16.mxu0 0
    %335 = vmatpush1.bf16.xpose.msra.mxu0 0
    %336 = vmatprep.subr.bf16.mxu0 0
    %337 = vmatpush1.bf16.xpose.msra.mxu0 0
    %338 = vmatprep.subr.bf16.mxu0 0
    %339 = vmatpush1.bf16.xpose.msra.mxu0 0
    %340 = vmatprep.mubr.bf16.mxu0 0
    %341 = vmatmul.mubr.bf16.gmra.mrb[0].mxu0 %v306
    %v342 = vpop.f32.mrb[0].mxu0
    %v343 = vadd.f32 0.0, %v342
    %v344 = vpop.f32.mrb[0].mxu0
    %v345 = vpop.f32.mrb[0].mxu0
    %v346 = vpop.f32.mrb[0].mxu0
    %347 = vdwg.mxu0
    %vm348 = vcmask 64512
    %349 = vst.msk [vmem:[#allocation15] sm:$0xff] %vm348, %v343
    %s350 = smul.u32 0, 8
    %s351 = scalar_lea.vmem [#allocation3], %s350
    %v352 = vld [vmem:[%s351] sm:$0xff]
    %v353 = vunpack.c.l.bf16 %v306
    %v354 = vmul.f32 %v353, %v352
    %355 = vadd.xlane.f32.xlu0 %v354
    %v356 = vpop.xlane.xlu0 %355
    %v357 = vsel %vm348, %v343, -inf
    %358 = vmax.xlane.f32.xlu0 %v357
    %v359 = vpop.xlane.xlu0 %358
    %v360 = vsub.f32 %v343, %v359
    %v361 = vmul.f32 %v360, 1.442695
    %v362 = vpow.pop %v361
    %v363 = vsel %vm348, %v362, 0.0
    %364 = vadd.xlane.f32.xlu0 %v363
    %v365 = vpop.xlane.xlu0 %364
    %v366 = vlog2.pop %v365
    %v367 = vmul.f32 %v366, 0.6931472
    %v368 = vadd.f32 %v367, %v359
    %v369 = vld [vmem:[#allocation6] sm:$0x1]
    %v370 = vsub.f32 %v368, %v356
    %v371 = vrot.slane %v370, 4
    %v372 = vadd.f32 %v370, %v371
    %v373 = vrot.slane %v372, 2
    %v374 = vadd.f32 %v372, %v373
    %v375 = vrot.slane %v374, 1
    %v376 = vadd.f32 %v374, %v375
    %v377 = vadd.f32 %v369, %v376
    %vm378 = vcmask 0
    %379 = vst.msk [vmem:[#allocation6] sm:$0x1] %vm378, %v377
    %v380 = vld [vmem:[#allocation7] sm:$0x1]
    %v381 = vrot.slane %v356, 4
    %v382 = vadd.f32 %v356, %v381
    %v383 = vrot.slane %v382, 2
    %v384 = vadd.f32 %v382, %v383
    %v385 = vrot.slane %v384, 1
    %v386 = vadd.f32 %v384, %v385
    %v387 = vadd.f32 %v380, %v386
    %388 = vst.msk [vmem:[#allocation7] sm:$0x1] %vm378, %v387
    %v389 = vrot.slane %v357, 4
    %v390 = vmax.f32 %v357, %v389
    %v391 = vrot.slane %v390, 2
    %v392 = vmax.f32 %v390, %v391
    %v393 = vrot.slane %v392, 1
    %v394 = vmax.f32 %v392, %v393
    %v395 = vld [vmem:[#allocation4] sm:$0x1]
    %v396 = vmax.f32 %v395, %v394
    %v397 = vld [vmem:[#allocation5] sm:$0x1]
    %v398 = vsub.f32 %v395, %v396
    %v399 = vmul.f32 %v398, 1.442695
    %v400 = vpow.pop %v399
    %v401 = vmul.f32 %v397, %v400
    %v403 = vlaneseq
    %v404 = vshrl.u32 %v403, 7
    %v405 = vsub.s32 0, %v404
    %v406 = vrot.slane %v396, %v405
    %v408 = vsub.f32 %v343, %v406
    %v409 = vmul.f32 %v408, 1.442695
    %v410 = vpow.pop %v409
    %v411 = vsel %vm348, %v410, 0.0
    %v412 = vrot.slane %v411, 4
    %v413 = vadd.f32 %v411, %v412
    %v414 = vrot.slane %v413, 2
    %v415 = vadd.f32 %v413, %v414
    %v416 = vrot.slane %v415, 1
    %v417 = vadd.f32 %v415, %v416
    %v418 = vadd.f32 %v401, %v417
    %vm419 = vcmask 57344
    %420 = vst.msk [vmem:[#allocation5] sm:$0x1] %vm419, %v418
    %421 = vst.msk [vmem:[#allocation4] sm:$0x1] %vm419, %v396
    // Predicated region
    $region38: #{tpu_custom_call.1} parent=1 // pred_check
      %p422 = pneg %p70
    $region39: #{tpu_custom_call.1} parent=1 // pred_check_branch
      %424 = sbr.rel (%p422) target = $region41
    $region40: #{tpu_custom_call.1} parent=1 // pred_region
      %v425 = vld [vmem:[#allocation5] sm:$0x1]
      %v426 = vlog2.pop %v425
      %v427 = vmul.f32 %v426, 0.6931472
      %v428 = vld [vmem:[#allocation4] sm:$0x1]
      %v429 = vadd.f32 %v427, %v428
      %v430 = vsel %vm419, %v429, 0.0
      %431 = vadd.xlane.f32.xlu0 %v430
      %v432 = vpop.xlane.xlu0 %431
      %v433 = vld [vmem:[#allocation7] sm:$0x1]
      %v434 = vsub.f32 %v432, %v433
      %v435 = vld [vmem:[#allocation6] sm:$0x1]
      %v436 = vadd.f32 %v434, %v435
      %v437 = vmul.f32 %v436, 0.0625
      %438 = vst.msk [vmem:[#allocation16] sm:$0x1] %vm378, %v437
    $region41: #{tpu_custom_call.1} parent=1 // pred_fallthru
      _
    // Predicated region
    $region42: #{tpu_custom_call.1} parent=1 // pred_check
      _
    $region43: #{tpu_custom_call.1} parent=1 // pred_check_branch
      %440 = sbr.rel (0) target = $region45
    $region44: #{tpu_custom_call.1} parent=1 // pred_region
      %s442 = ssub.s32 128, 128
      %443 = vsyncadd [#allocation11], %s442
      %s445 = sshll.u32 [#allocation15], 4
      %s446 = int_to_ptr.vmem [resolvable:$true] %s445
      %448 = dma.vmem_to_hbm [thread:$0]  %s446, 128, %s5, [#allocation11]
    $region45: #{tpu_custom_call.1} parent=1 // pred_fallthru
      _
    // Predicated region
    $region46: #{tpu_custom_call.1} parent=1 // pred_check
      _
    $region47: #{tpu_custom_call.1} parent=1 // pred_check_branch
      %450 = sbr.rel (0) target = $region49
    $region48: #{tpu_custom_call.1} parent=1 // pred_region
      %s452 = ssub.s32 16, 16
      %453 = vsyncadd [#allocation17], %s452
      %s455 = sshll.u32 [#allocation16], 4
      %s456 = int_to_ptr.vmem [resolvable:$true] %s455
      %458 = dma.vmem_to_hbm [thread:$0]  %s456, 16, %s6, [#allocation17]
    $region49: #{tpu_custom_call.1} parent=1 // pred_fallthru
      _
    // Predicated region
    $region50: #{tpu_custom_call.1} parent=1 // pred_check
      _
    $region51: #{tpu_custom_call.1} parent=1 // pred_check_branch
      %460 = sbr.rel (0) target = $region53
    $region52: #{tpu_custom_call.1} parent=1 // pred_region
      %461 = dma.done [#allocation11], 128
    $region53: #{tpu_custom_call.1} parent=1 // pred_fallthru
      _
    // Predicated region
    $region54: #{tpu_custom_call.1} parent=1 // pred_check
      _
    $region55: #{tpu_custom_call.1} parent=1 // pred_check_branch
      %463 = sbr.rel (0) target = $region57
    $region56: #{tpu_custom_call.1} parent=1 // pred_region
      %464 = dma.done [#allocation17], 16
    $region57: #{tpu_custom_call.1} parent=1 // pred_fallthru
      _
    %465 = vsyncpa [#allocation10], 1
    %466 = vsyncpa [#allocation13], 1
    %467 = vsyncpa [#allocation11], 1
    %468 = vsyncpa [#allocation17], 1

</llo_original>
